<compile_context>
chip_gen: v5e
topology: v5e:2x2
jax: 0.10.0
libtpu: 0.0.40
codegen_flags: <defaults>
</compile_context>

<pallas_src>
import functools

import jax
import jax.numpy as jnp
import numpy as np
from jax.experimental import pallas as pl
from jax.experimental.pallas import tpu as pltpu

NUM_EXPERTS = 4
TOP_K = 2


def _round_up(v, m):
    return ((v + m - 1) // m) * m


def _moe_act_kernel(x_ref, wrh_ref, brh_ref, we_ref, be_ref,
                    out_ref, psum_ref, wsum_ref,
                    *, num_experts, top_k, valid_tokens, needs_mask):
    E = num_experts
    TT, H = x_ref.shape

    x = x_ref[...]                                      # (TT, H), matmul dtype

    # ---------------- fused router + halting projection (one MXU pass) -------
    rh = jnp.dot(x, wrh_ref[...], preferred_element_type=jnp.float32)
    rh = rh + brh_ref[...]                              # (TT, 2E) f32
    logits = rh[:, :E]
    p_all = jax.nn.sigmoid(rh[:, E:])                   # (TT, E) halting probs

    # ---------------- softmax over experts ------------------------------------
    logits = logits - jnp.max(logits, axis=-1, keepdims=True)
    expz = jnp.exp(logits)
    probs = expz / jnp.sum(expz, axis=-1, keepdims=True)   # (TT, E)

    # ---------------- top-k selection (lowest-index tie-break == lax.top_k) ---
    iota_e = jax.lax.broadcasted_iota(jnp.int32, probs.shape, 1)
    remaining = probs
    denom = jnp.zeros((TT, 1), jnp.float32)
    sel = []
    for _ in range(top_k):
        m = jnp.max(remaining, axis=-1, keepdims=True)
        idx = jnp.min(jnp.where(remaining >= m, iota_e, E), axis=-1, keepdims=True)
        sel.append((m, idx))
        denom = denom + m
        remaining = jnp.where(iota_e == idx, -jnp.inf, remaining)
    inv_denom = 1.0 / denom
    ew = jnp.zeros_like(probs)                          # (TT, E) routing weight
    for m, idx in sel:
        ew = ew + jnp.where(iota_e == idx, m * inv_denom, 0.0)

    # ---------------- fused expert matmul: one (H, E*H) lane-dense MXU pass ---
    h_all = jnp.dot(x, we_ref[...], preferred_element_type=jnp.float32)
    h_all = jnp.tanh(h_all + be_ref[...])               # (TT, E*H) f32

    x32 = x.astype(jnp.float32)
    acc = jnp.zeros((TT, H), jnp.float32)
    for e in range(E):
        h_e = x32 + h_all[:, e * H:(e + 1) * H]
        acc = acc + h_e * ew[:, e:e + 1]
    out_ref[...] = acc.astype(out_ref.dtype)

    # ---------------- per-tile partial stats (finished in JAX afterwards) -----
    if needs_mask:
        row = (jax.lax.broadcasted_iota(jnp.int32, (TT, 1), 0)
               + pl.program_id(0) * TT)
        valid = (row < valid_tokens).astype(jnp.float32)
        p_stats = p_all * valid
        w_stats = ew * valid
    else:
        p_stats, w_stats = p_all, ew
    psum_ref[0] = jnp.sum(p_stats, axis=0, keepdims=True)   # (1, E)
    wsum_ref[0] = jnp.sum(w_stats, axis=0, keepdims=True)   # (1, E)


def moe_act_block(hidden_states, params, *, tile_tokens=256, matmul_dtype=None):
    """Pallas implementation of MoEACTBlock.forward.

    matmul_dtype: optionally cast x and the fused weight matrices (e.g. to
    jnp.bfloat16) for 2x MXU throughput on v6e/v7x; accumulation stays f32.
    """
    wr, br, we, be, wh, bh = params
    B, S, H = hidden_states.shape
    E = NUM_EXPERTS
    T = B * S

    # ---- wrapper-side weight fusion (layout plumbing, done once by XLA) ------
    w_rh = jnp.concatenate([wr, wh], axis=1)                     # (H, 2E)
    b_rh = jnp.concatenate([br, bh], axis=1).astype(jnp.float32)  # (1, 2E)
    we_f = jnp.transpose(we, (1, 0, 2)).reshape(H, E * H)        # (H, E*H)
    be_f = be.reshape(1, E * H).astype(jnp.float32)              # (1, E*H)

    x2 = hidden_states.reshape(T, H)
    if matmul_dtype is not None:
        x2 = x2.astype(matmul_dtype)
        w_rh = w_rh.astype(matmul_dtype)
        we_f = we_f.astype(matmul_dtype)

    # ---- token tiling (clamp to problem size, pad to a multiple of the tile) -
    tt = max(8, min(int(tile_tokens), _round_up(T, 8)))
    tt = _round_up(tt, 8)
    T_pad = _round_up(T, tt)
    if T_pad != T:
        x2 = jnp.pad(x2, ((0, T_pad - T), (0, 0)))
    n_tiles = T_pad // tt

    kernel = functools.partial(
        _moe_act_kernel,
        num_experts=E, top_k=TOP_K,
        valid_tokens=T, needs_mask=(T_pad != T))

    # ---- VMEM budget: resident fused weights + double-buffered token tiles ---
    x_b = x2.dtype.itemsize
    w_b = we_f.dtype.itemsize
    o_b = jnp.dtype(hidden_states.dtype).itemsize
    vmem_bytes = 2 * (
        tt * H * x_b + tt * H * o_b
        + H * 2 * E * w_b + 2 * E * 4
        + H * E * H * w_b + E * H * 4
        + 2 * 2 * E * 4)
    vmem_limit = min(int(vmem_bytes * 1.5) + (8 << 20), 64 << 20)
    # NOTE: for very large H, pass matmul_dtype=jnp.bfloat16 (and/or tile the
    # expert weight contraction dim) so the fused (H, E*H) weight stays resident.

    out, psums, wsums = pl.pallas_call(
        kernel,
        out_shape=(
            jax.ShapeDtypeStruct((T_pad, H), hidden_states.dtype),
            jax.ShapeDtypeStruct((n_tiles, 1, E), jnp.float32),
            jax.ShapeDtypeStruct((n_tiles, 1, E), jnp.float32),
        ),
        grid_spec=pltpu.PrefetchScalarGridSpec(
            num_scalar_prefetch=0,
            grid=(n_tiles,),
            in_specs=[
                pl.BlockSpec((tt, H), lambda i: (i, 0)),        # x tile
                pl.BlockSpec((H, 2 * E), lambda i: (0, 0)),     # fused Wr|Wh
                pl.BlockSpec((1, 2 * E), lambda i: (0, 0)),     # fused br|bh
                pl.BlockSpec((H, E * H), lambda i: (0, 0)),     # fused We
                pl.BlockSpec((1, E * H), lambda i: (0, 0)),     # fused be
            ],
            out_specs=(
                pl.BlockSpec((tt, H), lambda i: (i, 0)),        # combined out
                pl.BlockSpec((1, 1, E), lambda i: (i, 0, 0)),   # sum p_halt
                pl.BlockSpec((1, 1, E), lambda i: (i, 0, 0)),   # sum ew
            ),
        ),
        compiler_params=pltpu.CompilerParams(
            dimension_semantics=("parallel",),
            vmem_limit_bytes=vmem_limit),
    )(x2, w_rh, b_rh, we_f, be_f)

    out = out[:T].reshape(B, S, H)

    # ---- tiny final reduction in JAX (keeps the token grid axis parallel) ----
    inv_t = 1.0 / float(T)
    p_mean = jnp.sum(psums, axis=(0, 1)) * inv_t     # mean p_halt per expert
    w_mean = jnp.sum(wsums, axis=(0, 1)) * inv_t     # mean routing weight
    act_loss = jnp.sum(p_mean * w_mean)
    ponder = jnp.sum((1.0 - p_mean) * w_mean)
    return out, act_loss, ponder


def moe_act_block_ref(hidden_states, params):
    """Pure-JAX reference with identical semantics (for verification)."""
    wr, br, we, be, wh, bh = params
    B, S, H = hidden_states.shape
    with jax.default_matmul_precision("highest"):
        x = hidden_states.astype(jnp.float32)

        logits = x @ wr + br[0]
        probs = jax.nn.softmax(logits, axis=-1)
        topw, topi = jax.lax.top_k(probs, TOP_K)
        topw = topw / topw.sum(-1, keepdims=True)

        p_all = jax.nn.sigmoid(x @ wh + bh[0])           # (B, S, E)

        combined = jnp.zeros_like(x)
        act_loss = jnp.float32(0.0)
        ponder = jnp.float32(0.0)
        for e in range(NUM_EXPERTS):
            ew = jnp.zeros((B, S, 1), jnp.float32)
            for k in range(TOP_K):
                mask = (topi[..., k] == e)[..., None]
                ew = jnp.where(mask, topw[..., k:k + 1], ew)
            h_e = x + jnp.tanh(x @ we[e] + be[e, 0])
            combined = combined + h_e * ew
            expert_act = jnp.mean(p_all[..., e])
            expert_pond = jnp.mean(1.0 - p_all[..., e])
            act_loss = act_loss + expert_act * ew.mean()
            ponder = ponder + expert_pond * ew.mean()
    return combined, act_loss, ponder


def init_params(key, hidden_size, num_experts):
    ks = jax.random.split(key, 6)
    scale = 1.0 / np.sqrt(hidden_size)
    wr = jax.random.normal(ks[0], (hidden_size, num_experts), jnp.float32) * scale
    br = jax.random.normal(ks[1], (1, num_experts), jnp.float32) * 0.01
    we = jax.random.normal(ks[2], (num_experts, hidden_size, hidden_size),
                           jnp.float32) * scale
    be = jax.random.normal(ks[3], (num_experts, 1, hidden_size), jnp.float32) * 0.01
    wh = jax.random.normal(ks[4], (hidden_size, num_experts), jnp.float32) * scale
    bh = jax.random.normal(ks[5], (1, num_experts), jnp.float32) * 0.01
    return (wr, br, we, be, wh, bh)


if __name__ == "__main__":
    B, S, H = 2, 8, 32
    key = jax.random.PRNGKey(0)
    k_x, k_p = jax.random.split(key)
    x = jax.random.normal(k_x, (B, S, H), jnp.float32)
    params = init_params(k_p, H, NUM_EXPERTS)

    out_k, act_k, pond_k = moe_act_block(x, params)
    jax.block_until_ready((out_k, act_k, pond_k))

    out_r, act_r, pond_r = moe_act_block_ref(x, params)

    assert np.allclose(np.asarray(out_k), np.asarray(out_r),
                       rtol=1e-3, atol=1e-4), "combined_output mismatch"
    assert abs(float(act_k) - float(act_r)) < 1e-4, "act_loss mismatch"
    assert abs(float(pond_k) - float(pond_r)) < 1e-4, "ponder_cost mismatch"

    print("KERNEL_OK")
</pallas_src>

<mosaic_0001>
module attributes {stable_mosaic.version = 11 : i64} {
  func.func @_moe_act_kernel(%arg0: i32, %arg1: memref<16x32xf32, #tpu.memory_space<vmem>>, %arg2: memref<32x8xf32, #tpu.memory_space<vmem>>, %arg3: memref<1x8xf32, #tpu.memory_space<vmem>>, %arg4: memref<32x128xf32, #tpu.memory_space<vmem>>, %arg5: memref<1x128xf32, #tpu.memory_space<vmem>>, %arg6: memref<16x32xf32, #tpu.memory_space<vmem>>, %arg7: memref<1x1x4xf32, #tpu.memory_space<vmem>>, %arg8: memref<1x1x4xf32, #tpu.memory_space<vmem>>) attributes {dimension_semantics = [#tpu.dimension_semantics<parallel>], iteration_bounds = array<i64: 1>, scalar_prefetch = 0 : i64, scratch_operands = 0 : i64, tpu.core_type = #tpu.core_type<tc>, window_params = [{transform_indices = @transform_0, window_bounds = array<i64: 16, 32>}, {pipeline_mode = #tpu.pipeline_mode<synchronous>, transform_indices = @transform_1, window_bounds = array<i64: 32, 8>}, {pipeline_mode = #tpu.pipeline_mode<synchronous>, transform_indices = @transform_2, window_bounds = array<i64: 1, 8>}, {pipeline_mode = #tpu.pipeline_mode<synchronous>, transform_indices = @transform_3, window_bounds = array<i64: 32, 128>}, {pipeline_mode = #tpu.pipeline_mode<synchronous>, transform_indices = @transform_4, window_bounds = array<i64: 1, 128>}, {transform_indices = @transform_5, window_bounds = array<i64: 16, 32>}, {transform_indices = @transform_6, window_bounds = array<i64: 1, 1, 4>}, {transform_indices = @transform_7, window_bounds = array<i64: 1, 1, 4>}]} {
    %c0 = arith.constant 0 : index
    %c0_0 = arith.constant 0 : index
    %0 = vector.load %arg1[%c0, %c0_0] : memref<16x32xf32, #tpu.memory_space<vmem>>, vector<16x32xf32>
    %c0_1 = arith.constant 0 : index
    %c0_2 = arith.constant 0 : index
    %1 = vector.load %arg2[%c0_1, %c0_2] : memref<32x8xf32, #tpu.memory_space<vmem>>, vector<32x8xf32>
    %cst = arith.constant dense<0.000000e+00> : vector<16x8xf32>
    %2 = tpu.matmul %0, %1, %cst {dimension_numbers = #tpu.dot_dimension_numbers<[1], [0], [0], [1], [0, 0, 1, 1], [], []>} : vector<16x32xf32>, vector<32x8xf32>, vector<16x8xf32> -> vector<16x8xf32>
    %c0_3 = arith.constant 0 : index
    %c0_4 = arith.constant 0 : index
    %3 = vector.load %arg3[%c0_3, %c0_4] : memref<1x8xf32, #tpu.memory_space<vmem>>, vector<1x8xf32>
    %4 = vector.broadcast %3 : vector<1x8xf32> to vector<16x8xf32>
    %5 = arith.addf %2, %4 : vector<16x8xf32>
    %6 = vector.extract_strided_slice %5 {offsets = [0, 0], sizes = [16, 4], strides = [1, 1]} : vector<16x8xf32> to vector<16x4xf32>
    %7 = vector.extract_strided_slice %5 {offsets = [0, 4], sizes = [16, 4], strides = [1, 1]} : vector<16x8xf32> to vector<16x4xf32>
    %8 = arith.negf %7 : vector<16x4xf32>
    %9 = math.exp %8 : vector<16x4xf32>
    %cst_5 = arith.constant 1.000000e+00 : f32
    %10 = vector.broadcast %cst_5 : f32 to vector<16x4xf32>
    %11 = arith.addf %10, %9 : vector<16x4xf32>
    %12 = arith.divf %10, %11 : vector<16x4xf32>
    %cst_6 = arith.constant dense<0xFF800000> : vector<16xf32>
    %13 = vector.multi_reduction <maximumf>, %6, %cst_6 [1] : vector<16x4xf32> to vector<16xf32>
    %14 = vector.shape_cast %13 : vector<16xf32> to vector<16x1xf32>
    %15 = vector.broadcast %14 : vector<16x1xf32> to vector<16x4xf32>
    %16 = arith.subf %6, %15 : vector<16x4xf32>
    %17 = math.exp %16 : vector<16x4xf32>
    %cst_7 = arith.constant dense<0.000000e+00> : vector<16xf32>
    %18 = vector.multi_reduction <add>, %17, %cst_7 [1] : vector<16x4xf32> to vector<16xf32>
    %19 = vector.shape_cast %18 : vector<16xf32> to vector<16x1xf32>
    %20 = vector.broadcast %19 : vector<16x1xf32> to vector<16x4xf32>
    %21 = arith.divf %17, %20 : vector<16x4xf32>
    %22 = tpu.iota {dimensions = array<i32: 1>} : vector<16x4xi32>
    %cst_8 = arith.constant 0.000000e+00 : f32
    %23 = vector.broadcast %cst_8 : f32 to vector<16x1xf32>
    %cst_9 = arith.constant dense<0xFF800000> : vector<16xf32>
    %24 = vector.multi_reduction <maximumf>, %21, %cst_9 [1] : vector<16x4xf32> to vector<16xf32>
    %25 = vector.shape_cast %24 : vector<16xf32> to vector<16x1xf32>
    %26 = vector.broadcast %25 : vector<16x1xf32> to vector<16x4xf32>
    %27 = arith.cmpf oge, %21, %26 : vector<16x4xf32>
    %c4_i32 = arith.constant 4 : i32
    %28 = vector.broadcast %c4_i32 : i32 to vector<16x4xi32>
    %29 = arith.select %27, %22, %28 : vector<16x4xi1>, vector<16x4xi32>
    %cst_10 = arith.constant dense<2147483647> : vector<16xi32>
    %30 = vector.multi_reduction <minsi>, %29, %cst_10 [1] : vector<16x4xi32> to vector<16xi32>
    %31 = vector.shape_cast %30 : vector<16xi32> to vector<16x1xi32>
    %32 = arith.addf %23, %25 : vector<16x1xf32>
    %33 = vector.broadcast %31 : vector<16x1xi32> to vector<16x4xi32>
    %34 = arith.cmpi eq, %22, %33 : vector<16x4xi32>
    %cst_11 = arith.constant 0xFF800000 : f32
    %35 = vector.broadcast %cst_11 : f32 to vector<16x4xf32>
    %36 = arith.select %34, %35, %21 : vector<16x4xi1>, vector<16x4xf32>
    %cst_12 = arith.constant dense<0xFF800000> : vector<16xf32>
    %37 = vector.multi_reduction <maximumf>, %36, %cst_12 [1] : vector<16x4xf32> to vector<16xf32>
    %38 = vector.shape_cast %37 : vector<16xf32> to vector<16x1xf32>
    %39 = vector.broadcast %38 : vector<16x1xf32> to vector<16x4xf32>
    %40 = arith.cmpf oge, %36, %39 : vector<16x4xf32>
    %c4_i32_13 = arith.constant 4 : i32
    %41 = vector.broadcast %c4_i32_13 : i32 to vector<16x4xi32>
    %42 = arith.select %40, %22, %41 : vector<16x4xi1>, vector<16x4xi32>
    %cst_14 = arith.constant dense<2147483647> : vector<16xi32>
    %43 = vector.multi_reduction <minsi>, %42, %cst_14 [1] : vector<16x4xi32> to vector<16xi32>
    %44 = vector.shape_cast %43 : vector<16xi32> to vector<16x1xi32>
    %45 = arith.addf %32, %38 : vector<16x1xf32>
    %cst_15 = arith.constant 1.000000e+00 : f32
    %46 = vector.broadcast %cst_15 : f32 to vector<16x1xf32>
    %47 = arith.divf %46, %45 : vector<16x1xf32>
    %cst_16 = arith.constant 0.000000e+00 : f32
    %48 = vector.broadcast %cst_16 : f32 to vector<16x4xf32>
    %49 = vector.broadcast %31 : vector<16x1xi32> to vector<16x4xi32>
    %50 = arith.cmpi eq, %22, %49 : vector<16x4xi32>
    %51 = arith.mulf %25, %47 : vector<16x1xf32>
    %cst_17 = arith.constant 0.000000e+00 : f32
    %52 = vector.shape_cast %51 : vector<16x1xf32> to vector<16x1xf32>
    %53 = vector.broadcast %52 : vector<16x1xf32> to vector<16x4xf32>
    %54 = vector.broadcast %cst_17 : f32 to vector<16x4xf32>
    %55 = arith.select %50, %53, %54 : vector<16x4xi1>, vector<16x4xf32>
    %56 = arith.addf %48, %55 : vector<16x4xf32>
    %57 = vector.broadcast %44 : vector<16x1xi32> to vector<16x4xi32>
    %58 = arith.cmpi eq, %22, %57 : vector<16x4xi32>
    %59 = arith.mulf %38, %47 : vector<16x1xf32>
    %cst_18 = arith.constant 0.000000e+00 : f32
    %60 = vector.shape_cast %59 : vector<16x1xf32> to vector<16x1xf32>
    %61 = vector.broadcast %60 : vector<16x1xf32> to vector<16x4xf32>
    %62 = vector.broadcast %cst_18 : f32 to vector<16x4xf32>
    %63 = arith.select %58, %61, %62 : vector<16x4xi1>, vector<16x4xf32>
    %64 = arith.addf %56, %63 : vector<16x4xf32>
    %c0_19 = arith.constant 0 : index
    %c0_20 = arith.constant 0 : index
    %65 = vector.load %arg4[%c0_19, %c0_20] : memref<32x128xf32, #tpu.memory_space<vmem>>, vector<32x128xf32>
    %cst_21 = arith.constant dense<0.000000e+00> : vector<16x128xf32>
    %66 = tpu.matmul %0, %65, %cst_21 {dimension_numbers = #tpu.dot_dimension_numbers<[1], [0], [0], [1], [0, 0, 1, 1], [], []>} : vector<16x32xf32>, vector<32x128xf32>, vector<16x128xf32> -> vector<16x128xf32>
    %c0_22 = arith.constant 0 : index
    %c0_23 = arith.constant 0 : index
    %67 = vector.load %arg5[%c0_22, %c0_23] : memref<1x128xf32, #tpu.memory_space<vmem>>, vector<1x128xf32>
    %68 = vector.broadcast %67 : vector<1x128xf32> to vector<16x128xf32>
    %69 = arith.addf %66, %68 : vector<16x128xf32>
    %70 = math.tanh %69 : vector<16x128xf32>
    %cst_24 = arith.constant 0.000000e+00 : f32
    %71 = vector.broadcast %cst_24 : f32 to vector<16x32xf32>
    %72 = vector.extract_strided_slice %70 {offsets = [0, 0], sizes = [16, 32], strides = [1, 1]} : vector<16x128xf32> to vector<16x32xf32>
    %73 = arith.addf %0, %72 : vector<16x32xf32>
    %74 = vector.extract_strided_slice %64 {offsets = [0, 0], sizes = [16, 1], strides = [1, 1]} : vector<16x4xf32> to vector<16x1xf32>
    %75 = vector.broadcast %74 : vector<16x1xf32> to vector<16x32xf32>
    %76 = arith.mulf %73, %75 : vector<16x32xf32>
    %77 = arith.addf %71, %76 : vector<16x32xf32>
    %78 = vector.extract_strided_slice %70 {offsets = [0, 32], sizes = [16, 32], strides = [1, 1]} : vector<16x128xf32> to vector<16x32xf32>
    %79 = arith.addf %0, %78 : vector<16x32xf32>
    %80 = vector.extract_strided_slice %64 {offsets = [0, 1], sizes = [16, 1], strides = [1, 1]} : vector<16x4xf32> to vector<16x1xf32>
    %81 = vector.broadcast %80 : vector<16x1xf32> to vector<16x32xf32>
    %82 = arith.mulf %79, %81 : vector<16x32xf32>
    %83 = arith.addf %77, %82 : vector<16x32xf32>
    %84 = vector.extract_strided_slice %70 {offsets = [0, 64], sizes = [16, 32], strides = [1, 1]} : vector<16x128xf32> to vector<16x32xf32>
    %85 = arith.addf %0, %84 : vector<16x32xf32>
    %86 = vector.extract_strided_slice %64 {offsets = [0, 2], sizes = [16, 1], strides = [1, 1]} : vector<16x4xf32> to vector<16x1xf32>
    %87 = vector.broadcast %86 : vector<16x1xf32> to vector<16x32xf32>
    %88 = arith.mulf %85, %87 : vector<16x32xf32>
    %89 = arith.addf %83, %88 : vector<16x32xf32>
    %90 = vector.extract_strided_slice %70 {offsets = [0, 96], sizes = [16, 32], strides = [1, 1]} : vector<16x128xf32> to vector<16x32xf32>
    %91 = arith.addf %0, %90 : vector<16x32xf32>
    %92 = vector.extract_strided_slice %64 {offsets = [0, 3], sizes = [16, 1], strides = [1, 1]} : vector<16x4xf32> to vector<16x1xf32>
    %93 = vector.broadcast %92 : vector<16x1xf32> to vector<16x32xf32>
    %94 = arith.mulf %91, %93 : vector<16x32xf32>
    %95 = arith.addf %89, %94 : vector<16x32xf32>
    %c0_25 = arith.constant 0 : index
    %c0_26 = arith.constant 0 : index
    %96 = vector.load %arg6[%c0_25, %c0_26] : memref<16x32xf32, #tpu.memory_space<vmem>>, vector<16x32xf32>
    tpu.vector_store %arg6[%c0_25, %c0_26], %95 {strides = array<i32>} : memref<16x32xf32, #tpu.memory_space<vmem>>, vector<16x32xf32>,
    %cst_27 = arith.constant dense<0.000000e+00> : vector<4xf32>
    %97 = vector.multi_reduction <add>, %12, %cst_27 [0] : vector<16x4xf32> to vector<4xf32>
    %98 = vector.shape_cast %97 : vector<4xf32> to vector<1x4xf32>
    %c0_28 = arith.constant 0 : index
    %c0_29 = arith.constant 0 : index
    %c0_30 = arith.constant 0 : index
    %99 = vector.load %arg7[%c0_28, %c0_29, %c0_30] : memref<1x1x4xf32, #tpu.memory_space<vmem>>, vector<1x1x4xf32>
    %100 = vector.shape_cast %99 : vector<1x1x4xf32> to vector<1x4xf32>
    %101 = vector.shape_cast %98 : vector<1x4xf32> to vector<1x1x4xf32>
    tpu.vector_store %arg7[%c0_28, %c0_29, %c0_30], %101 {strides = array<i32>} : memref<1x1x4xf32, #tpu.memory_space<vmem>>, vector<1x1x4xf32>,
    %cst_31 = arith.constant dense<0.000000e+00> : vector<4xf32>
    %102 = vector.multi_reduction <add>, %64, %cst_31 [0] : vector<16x4xf32> to vector<4xf32>
    %103 = vector.shape_cast %102 : vector<4xf32> to vector<1x4xf32>
    %c0_32 = arith.constant 0 : index
    %c0_33 = arith.constant 0 : index
    %c0_34 = arith.constant 0 : index
    %104 = vector.load %arg8[%c0_32, %c0_33, %c0_34] : memref<1x1x4xf32, #tpu.memory_space<vmem>>, vector<1x1x4xf32>
    %105 = vector.shape_cast %104 : vector<1x1x4xf32> to vector<1x4xf32>
    %106 = vector.shape_cast %103 : vector<1x4xf32> to vector<1x1x4xf32>
    tpu.vector_store %arg8[%c0_32, %c0_33, %c0_34], %106 {strides = array<i32>} : memref<1x1x4xf32, #tpu.memory_space<vmem>>, vector<1x1x4xf32>,
    return
  }
  func.func @transform_0(%arg0: i32) -> (i32, i32) {
    %c0_i32 = arith.constant 0 : i32
    %c0_i32_0 = arith.constant 0 : i32
    return %arg0, %c0_i32 : i32, i32
  }
  func.func @transform_1(%arg0: i32) -> (i32, i32) {
    %c0_i32 = arith.constant 0 : i32
    %c0_i32_0 = arith.constant 0 : i32
    %c0_i32_1 = arith.constant 0 : i32
    return %c0_i32, %c0_i32_0 : i32, i32
  }
  func.func @transform_2(%arg0: i32) -> (i32, i32) {
    %c0_i32 = arith.constant 0 : i32
    %c0_i32_0 = arith.constant 0 : i32
    %c0_i32_1 = arith.constant 0 : i32
    return %c0_i32, %c0_i32_0 : i32, i32
  }
  func.func @transform_3(%arg0: i32) -> (i32, i32) {
    %c0_i32 = arith.constant 0 : i32
    %c0_i32_0 = arith.constant 0 : i32
    %c0_i32_1 = arith.constant 0 : i32
    return %c0_i32, %c0_i32_0 : i32, i32
  }
  func.func @transform_4(%arg0: i32) -> (i32, i32) {
    %c0_i32 = arith.constant 0 : i32
    %c0_i32_0 = arith.constant 0 : i32
    %c0_i32_1 = arith.constant 0 : i32
    return %c0_i32, %c0_i32_0 : i32, i32
  }
  func.func @transform_5(%arg0: i32) -> (i32, i32) {
    %c0_i32 = arith.constant 0 : i32
    %c0_i32_0 = arith.constant 0 : i32
    return %arg0, %c0_i32 : i32, i32
  }
  func.func @transform_6(%arg0: i32) -> (i32, i32, i32) {
    %c0_i32 = arith.constant 0 : i32
    %c0_i32_0 = arith.constant 0 : i32
    %c0_i32_1 = arith.constant 0 : i32
    return %arg0, %c0_i32, %c0_i32_0 : i32, i32, i32
  }
  func.func @transform_7(%arg0: i32) -> (i32, i32, i32) {
    %c0_i32 = arith.constant 0 : i32
    %c0_i32_0 = arith.constant 0 : i32
    %c0_i32_1 = arith.constant 0 : i32
    return %arg0, %c0_i32, %c0_i32_0 : i32, i32, i32
  }
}

</mosaic_0001>

<llo_original>
// kernel: tpu_custom_call.1
$region0: #{tpu_custom_call.1}
  #allocation0 [shape = 'u32[]', space=smem, size = 0x4, offset = 0x4, fixed_abs, tag = 'smem constant byte address 0x4 - core index']
  #allocation1 [shape = 'u32[72,128]{1,0:T(1,128)}', space=vmem, size = 0x9000, scoped, tag = 'internal scratch']
  %s0 = inlined_call_operand.hbm [shape: f32[16,32], index: 0, kind: input, shape index: {}]
  %s1 = inlined_call_operand.vmem [shape: f32[32,8], index: 1, kind: input, shape index: {}]
  %s2 = inlined_call_operand.vmem [shape: f32[1,8], index: 2, kind: input, shape index: {}]
  %s3 = inlined_call_operand.vmem [shape: f32[32,128], index: 3, kind: input, shape index: {}]
  %s4 = inlined_call_operand.vmem [shape: f32[1,128], index: 4, kind: input, shape index: {}]
  %s5 = inlined_call_operand.hbm [shape: f32[16,32], index: 5, kind: output, shape index: {0}]
  %s6 = inlined_call_operand.hbm [shape: f32[1,1,4], index: 6, kind: output, shape index: {1}]
  %s7 = inlined_call_operand.hbm [shape: f32[1,1,4], index: 7, kind: output, shape index: {2}]
  %8 = xla_tuple %s5, %s6, %s7
  %s9 = sld [smem:[#allocation0]]
  $region50: #{tpu_custom_call.1} parent=0
    _
  %s11 = ssub.s32 1, %s9
  %s12 = scalar_select 0, %s11, %s9
  $region1: #{tpu_custom_call.1} parent=0
    #allocation2 [shape = 'u8[8192]{0}', space=vmem, size = 0x2000, scoped, tag = 'input window, operand 0, single buffered']
    #allocation3 [shape = 's32[1]{0}', space=sflag, size = 0x4, scoped, tag = 'scoped memory for tpu_custom_call.1']
    #allocation4 [shape = 's32[1]{0}', space=sflag, size = 0x4, scoped, tag = 'scoped memory for tpu_custom_call.1']
    #allocation5 [shape = 'u8[8192]{0}', space=vmem, size = 0x2000, scoped, tag = 'output window, operand 0, single buffered']
    #allocation6 [shape = 'u8[512]{0}', space=vmem, size = 0x400, scoped, tag = 'output window, operand 1, single buffered']
    #allocation7 [shape = 's32[1]{0}', space=sflag, size = 0x4, scoped, tag = 'scoped memory for tpu_custom_call.1']
    #allocation8 [shape = 'u8[512]{0}', space=vmem, size = 0x400, scoped, tag = 'output window, operand 2, single buffered']
    %13 = vsyncpa [#allocation3], 0
    %14 = vsyncpa [#allocation4], 0
    %15 = vsyncpa [#allocation7], 0
    // Predicated region
    $region2: #{tpu_custom_call.1} parent=1 // pred_check
      _
    $region3: #{tpu_custom_call.1} parent=1 // pred_check_branch
      %17 = sbr.rel (0) target = $region5
    $region4: #{tpu_custom_call.1} parent=1 // pred_region
      %19 = vsyncadd [#allocation3], 0
      %s20 = sshll.u32 %s0, 4
      %s21 = int_to_ptr.hbm [resolvable:$true] %s20
      %s22 = sshll.u32 [#allocation2], 4
      %s23 = int_to_ptr.vmem [resolvable:$true] %s22
      %28 = dma.hbm_to_vmem [thread:$0]  %s21, 256, %s23, [#allocation3], 128, 128, 8
    $region5: #{tpu_custom_call.1} parent=1 // pred_fallthru
      _
    // Predicated region
    $region6: #{tpu_custom_call.1} parent=1 // pred_check
      _
    $region7: #{tpu_custom_call.1} parent=1 // pred_check_branch
      %30 = sbr.rel (0) target = $region9
    $region8: #{tpu_custom_call.1} parent=1 // pred_region
      _
    $region9: #{tpu_custom_call.1} parent=1 // pred_fallthru
      _
    // Predicated region
    $region10: #{tpu_custom_call.1} parent=1 // pred_check
      _
    $region11: #{tpu_custom_call.1} parent=1 // pred_check_branch
      %32 = sbr.rel (0) target = $region13
    $region12: #{tpu_custom_call.1} parent=1 // pred_region
      _
    $region13: #{tpu_custom_call.1} parent=1 // pred_fallthru
      _
    // Predicated region
    $region14: #{tpu_custom_call.1} parent=1 // pred_check
      _
    $region15: #{tpu_custom_call.1} parent=1 // pred_check_branch
      %34 = sbr.rel (0) target = $region17
    $region16: #{tpu_custom_call.1} parent=1 // pred_region
      _
    $region17: #{tpu_custom_call.1} parent=1 // pred_fallthru
      _
    // Predicated region
    $region18: #{tpu_custom_call.1} parent=1 // pred_check
      _
    $region19: #{tpu_custom_call.1} parent=1 // pred_check_branch
      %36 = sbr.rel (0) target = $region21
    $region20: #{tpu_custom_call.1} parent=1 // pred_region
      _
    $region21: #{tpu_custom_call.1} parent=1 // pred_fallthru
      _
    // Predicated region
    $region22: #{tpu_custom_call.1} parent=1 // pred_check
      _
    $region23: #{tpu_custom_call.1} parent=1 // pred_check_branch
      %38 = sbr.rel (0) target = $region25
    $region24: #{tpu_custom_call.1} parent=1 // pred_region
      %40 = dma.done [#allocation3], 256
    $region25: #{tpu_custom_call.1} parent=1 // pred_fallthru
      _
    %v41 = vld [vmem:[#allocation2] sm:$0xff]
    %v42 = vld [vmem:[#allocation2 + $0x8] sm:$0xff]
    %v43 = vld [vmem:[%s1] sm:$0xff]
    %v44 = vld [vmem:[%s1 + $0x8] sm:$0xff]
    %v45 = vld [vmem:[%s1 + $0x10] sm:$0xff]
    %v46 = vld [vmem:[%s1 + $0x18] sm:$0xff]
    %v47 = vld [vmem:[%s2] sm:$0x1]
    %v49 = vperm.slane %v47, 0
    %vm51 = vcmask 261120
    %v53 = vsel %vm51, %v41, 0
    %v56 = vsel %vm51, %v42, 0
    %58 = vmatpush.msra.mxu0 0.0
    %59 = vmatpush.msra.mxu0 0.0
    %60 = vmatpush.msra.mxu0 0.0
    %61 = vmatpush.msra.mxu0 0.0
    %62 = vmatpush.msra.mxu0 0.0
    %63 = vmatpush.msra.mxu0 0.0
    %64 = vmatpush.msra.mxu0 0.0
    %65 = vmatpush.msra.mxu0 0.0
    %66 = vmatpush.msra.mxu0 0.0
    %67 = vmatpush.msra.mxu0 0.0
    %68 = vmatpush.msra.mxu0 0.0
    %69 = vmatpush.msra.mxu0 0.0
    %70 = vmatpush.msra.mxu0 %v46
    %71 = vmatpush.msra.mxu0 %v45
    %72 = vmatpush.msra.mxu0 %v44
    %73 = vmatpush.msra.mxu0 %v43
    %74 = vmatmul.f32.gmra.mxu0 %v53
    %v75 = vpop.f32.mrf.mxu0
    %v76 = vadd.f32 %v49, %v75
    %77 = vmatmul.f32.gmra.mxu0 %v56
    %v78 = vpop.f32.mrf.mxu0
    %v79 = vadd.f32 %v49, %v78
    %80 = vdwg.mxu0
    %v81 = vxor.u32 %v76, 2147483648
    %v82 = vxor.u32 %v79, 2147483648
    %v83 = vmul.f32 %v81, 1.442695
    %v84 = vpow.pop %v83
    %v85 = vmul.f32 %v82, 1.442695
    %v86 = vpow.pop %v85
    %v87 = vadd.f32 %v84, 1.0
    %v88 = vadd.f32 %v86, 1.0
    %v89 = vrcp.pop %v87
    %v90 = vmul.f32 %v87, %v89
    %v91 = vsub.f32 1.0, %v90
    %v92 = vmul.f32 %v89, %v91
    %v93 = vadd.f32 %v89, %v92
    %vm94 = vweird.f32 %v87
    %vm95 = vweird.f32 %v89
    %vm96 = vmor %vm94, %vm95
    %v97 = vsel %vm96, %v89, %v93
    %v98 = vand.u32 2147483647, %v87
    %vm99 = vcmp.eq.f32.partialorder %v98, 8.507059e+37
    %v100 = vand.u32 %v87, 2147483648
    %v101 = vor.u32 1.1754944e-38, %v100
    %v102 = vsel %vm99, %v101, %v97
    %v103 = vmul.f32 1.0, %v102
    %v104 = vrcp.pop %v88
    %v105 = vmul.f32 %v88, %v104
    %v106 = vsub.f32 1.0, %v105
    %v107 = vmul.f32 %v104, %v106
    %v108 = vadd.f32 %v104, %v107
    %vm109 = vweird.f32 %v88
    %vm110 = vweird.f32 %v104
    %vm111 = vmor %vm109, %vm110
    %v112 = vsel %vm111, %v104, %v108
    %v113 = vand.u32 2147483647, %v88
    %vm114 = vcmp.eq.f32.partialorder %v113, 8.507059e+37
    %v115 = vand.u32 %v88, 2147483648
    %v116 = vor.u32 1.1754944e-38, %v115
    %v117 = vsel %vm114, %v116, %v112
    %v118 = vmul.f32 1.0, %v117
    %vm119 = vcmask 31744
    %v120 = vsel %vm119, %v76, -inf
    %121 = vmax.xlane.f32.xlu0 %v120
    %v122 = vpop.xlane.xlu0 %121
    %v123 = vsel %vm119, %v79, -inf
    %124 = vmax.xlane.f32.xlu0 %v123
    %v125 = vpop.xlane.xlu0 %124
    %v126 = vsub.f32 %v76, %v122
    %v127 = vsub.f32 %v79, %v125
    %v128 = vmul.f32 %v126, 1.442695
    %v129 = vpow.pop %v128
    %v130 = vmul.f32 %v127, 1.442695
    %v131 = vpow.pop %v130
    %v132 = vsel %vm119, %v129, 0.0
    %133 = vadd.xlane.f32.xlu0 %v132
    %v134 = vpop.xlane.xlu0 %133
    %v135 = vsel %vm119, %v131, 0.0
    %136 = vadd.xlane.f32.xlu0 %v135
    %v137 = vpop.xlane.xlu0 %136
    %v138 = vrcp.pop %v134
    %v139 = vmul.f32 %v134, %v138
    %v140 = vsub.f32 1.0, %v139
    %v141 = vmul.f32 %v138, %v140
    %v142 = vadd.f32 %v138, %v141
    %vm143 = vweird.f32 %v134
    %vm144 = vweird.f32 %v138
    %vm145 = vmor %vm143, %vm144
    %v146 = vsel %vm145, %v138, %v142
    %v147 = vand.u32 2147483647, %v134
    %vm148 = vcmp.eq.f32.partialorder %v147, 8.507059e+37
    %v149 = vand.u32 %v134, 2147483648
    %v150 = vor.u32 1.1754944e-38, %v149
    %v151 = vsel %vm148, %v150, %v146
    %v152 = vmul.f32 %v129, %v151
    %v153 = vrcp.pop %v137
    %v154 = vmul.f32 %v137, %v153
    %v155 = vsub.f32 1.0, %v154
    %v156 = vmul.f32 %v153, %v155
    %v157 = vadd.f32 %v153, %v156
    %vm158 = vweird.f32 %v137
    %vm159 = vweird.f32 %v153
    %vm160 = vmor %vm158, %vm159
    %v161 = vsel %vm160, %v153, %v157
    %v162 = vand.u32 2147483647, %v137
    %vm163 = vcmp.eq.f32.partialorder %v162, 8.507059e+37
    %v164 = vand.u32 %v137, 2147483648
    %v165 = vor.u32 1.1754944e-38, %v164
    %v166 = vsel %vm163, %v165, %v161
    %v167 = vmul.f32 %v131, %v166
    %v168 = vlaneseq
    %v169 = vand.u32 %v168, 127
    %v170 = vsel %vm119, %v152, -inf
    %171 = vmax.xlane.f32.xlu0 %v170
    %v172 = vpop.xlane.xlu0 %171
    %v173 = vsel %vm119, %v167, -inf
    %174 = vmax.xlane.f32.xlu0 %v173
    %v175 = vpop.xlane.xlu0 %174
    %vm176 = vcmp.ge.f32.partialorder %v152, %v172
    %vm177 = vcmp.ge.f32.partialorder %v167, %v175
    %v178 = vsel %vm176, %v169, 4
    %v179 = vsel %vm177, %v169, 4
    %v180 = vsel %vm119, %v178, 2147483647
    %v181 = vand.u32 %v180, 65535
    %v182 = vshra.s32 %v180, 16
    %v183 = vcvt.s32.f32 %v181
    %v184 = vcvt.s32.f32 %v182
    %185 = vmin.xlane.f32.xlu0 %v184
    %v186 = vpop.xlane.xlu0 %185
    %vm187 = vcmp.eq.f32.partialorder %v184, %v186
    %v188 = vsel %vm187, %v183, inf
    %189 = vmin.xlane.f32.xlu0 %v188
    %v190 = vpop.xlane.xlu0 %189
    %v191 = vcvt.f32.s32 %v190
    %v192 = vcvt.f32.s32 %v186
    %v193 = vshll.u32 %v192, 16
    %v194 = vadd.s32 %v193, %v191
    %v195 = vsel %vm119, %v179, 2147483647
    %v196 = vand.u32 %v195, 65535
    %v197 = vshra.s32 %v195, 16
    %v198 = vcvt.s32.f32 %v196
    %v199 = vcvt.s32.f32 %v197
    %200 = vmin.xlane.f32.xlu0 %v199
    %v201 = vpop.xlane.xlu0 %200
    %vm202 = vcmp.eq.f32.partialorder %v199, %v201
    %v203 = vsel %vm202, %v198, inf
    %204 = vmin.xlane.f32.xlu0 %v203
    %v205 = vpop.xlane.xlu0 %204
    %v206 = vcvt.f32.s32 %v205
    %v207 = vcvt.f32.s32 %v201
    %v208 = vshll.u32 %v207, 16
    %v209 = vadd.s32 %v208, %v206
    %v210 = vadd.f32 %v172, 0.0
    %v211 = vadd.f32 %v175, 0.0
    %vm212 = vcmp.eq.s32.totalorder %v169, %v194
    %vm213 = vcmp.eq.s32.totalorder %v169, %v209
    %v214 = vsel %vm212, -inf, %v152
    %v215 = vsel %vm213, -inf, %v167
    %v216 = vsel %vm119, %v214, -inf
    %217 = vmax.xlane.f32.xlu0 %v216
    %v218 = vpop.xlane.xlu0 %217
    %v219 = vsel %vm119, %v215, -inf
    %220 = vmax.xlane.f32.xlu0 %v219
    %v221 = vpop.xlane.xlu0 %220
    %vm222 = vcmp.ge.f32.partialorder %v214, %v218
    %vm223 = vcmp.ge.f32.partialorder %v215, %v221
    %v224 = vsel %vm222, %v169, 4
    %v225 = vsel %vm223, %v169, 4
    %v226 = vsel %vm119, %v224, 2147483647
    %v227 = vand.u32 %v226, 65535
    %v228 = vshra.s32 %v226, 16
    %v229 = vcvt.s32.f32 %v227
    %v230 = vcvt.s32.f32 %v228
    %231 = vmin.xlane.f32.xlu0 %v230
    %v232 = vpop.xlane.xlu0 %231
    %vm233 = vcmp.eq.f32.partialorder %v230, %v232
    %v234 = vsel %vm233, %v229, inf
    %235 = vmin.xlane.f32.xlu0 %v234
    %v236 = vpop.xlane.xlu0 %235
    %v237 = vcvt.f32.s32 %v236
    %v238 = vcvt.f32.s32 %v232
    %v239 = vshll.u32 %v238, 16
    %v240 = vadd.s32 %v239, %v237
    %v241 = vsel %vm119, %v225, 2147483647
    %v242 = vand.u32 %v241, 65535
    %v243 = vshra.s32 %v241, 16
    %v244 = vcvt.s32.f32 %v242
    %v245 = vcvt.s32.f32 %v243
    %246 = vmin.xlane.f32.xlu0 %v245
    %v247 = vpop.xlane.xlu0 %246
    %vm248 = vcmp.eq.f32.partialorder %v245, %v247
    %v249 = vsel %vm248, %v244, inf
    %250 = vmin.xlane.f32.xlu0 %v249
    %v251 = vpop.xlane.xlu0 %250
    %v252 = vcvt.f32.s32 %v251
    %v253 = vcvt.f32.s32 %v247
    %v254 = vshll.u32 %v253, 16
    %v255 = vadd.s32 %v254, %v252
    %v256 = vadd.f32 %v210, %v218
    %v257 = vadd.f32 %v211, %v221
    %v258 = vrcp.pop %v256
    %v259 = vmul.f32 %v256, %v258
    %v260 = vsub.f32 1.0, %v259
    %v261 = vmul.f32 %v258, %v260
    %v262 = vadd.f32 %v258, %v261
    %vm263 = vweird.f32 %v256
    %vm264 = vweird.f32 %v258
    %vm265 = vmor %vm263, %vm264
    %v266 = vsel %vm265, %v258, %v262
    %v267 = vand.u32 2147483647, %v256
    %vm268 = vcmp.eq.f32.partialorder %v267, 8.507059e+37
    %v269 = vand.u32 %v256, 2147483648
    %v270 = vor.u32 1.1754944e-38, %v269
    %v271 = vsel %vm268, %v270, %v266
    %v272 = vmul.f32 1.0, %v271
    %v273 = vrcp.pop %v257
    %v274 = vmul.f32 %v257, %v273
    %v275 = vsub.f32 1.0, %v274
    %v276 = vmul.f32 %v273, %v275
    %v277 = vadd.f32 %v273, %v276
    %vm278 = vweird.f32 %v257
    %vm279 = vweird.f32 %v273
    %vm280 = vmor %vm278, %vm279
    %v281 = vsel %vm280, %v273, %v277
    %v282 = vand.u32 2147483647, %v257
    %vm283 = vcmp.eq.f32.partialorder %v282, 8.507059e+37
    %v284 = vand.u32 %v257, 2147483648
    %v285 = vor.u32 1.1754944e-38, %v284
    %v286 = vsel %vm283, %v285, %v281
    %v287 = vmul.f32 1.0, %v286
    %v288 = vmul.f32 %v172, %v272
    %v289 = vmul.f32 %v175, %v287
    %v290 = vsel %vm212, %v288, 0.0
    %v291 = vsel %vm213, %v289, 0.0
    %v292 = vadd.f32 %v290, 0.0
    %v293 = vadd.f32 %v291, 0.0
    %vm294 = vcmp.eq.s32.totalorder %v169, %v240
    %vm295 = vcmp.eq.s32.totalorder %v169, %v255
    %v296 = vmul.f32 %v218, %v272
    %v297 = vmul.f32 %v221, %v287
    %v298 = vsel %vm294, %v296, 0.0
    %v299 = vsel %vm295, %v297, 0.0
    %v300 = vadd.f32 %v292, %v298
    %v301 = vadd.f32 %v293, %v299
    %v302 = vld [vmem:[%s3] sm:$0xff]
    %v303 = vld [vmem:[%s3 + $0x8] sm:$0xff]
    %v304 = vld [vmem:[%s3 + $0x10] sm:$0xff]
    %v305 = vld [vmem:[%s3 + $0x18] sm:$0xff]
    %v306 = vld [vmem:[%s4] sm:$0x1]
    %v308 = vperm.slane %v306, 0
    %310 = vmatpush.msra.mxu0 0.0
    %311 = vmatpush.msra.mxu0 0.0
    %312 = vmatpush.msra.mxu0 0.0
    %313 = vmatpush.msra.mxu0 0.0
    %314 = vmatpush.msra.mxu0 0.0
    %315 = vmatpush.msra.mxu0 0.0
    %316 = vmatpush.msra.mxu0 0.0
    %317 = vmatpush.msra.mxu0 0.0
    %318 = vmatpush.msra.mxu0 0.0
    %319 = vmatpush.msra.mxu0 0.0
    %320 = vmatpush.msra.mxu0 0.0
    %321 = vmatpush.msra.mxu0 0.0
    %322 = vmatpush.msra.mxu0 %v305
    %323 = vmatpush.msra.mxu0 %v304
    %324 = vmatpush.msra.mxu0 %v303
    %325 = vmatpush.msra.mxu0 %v302
    %326 = vmatmul.f32.gmra.mxu0 %v53
    %v327 = vpop.f32.mrf.mxu0
    %v328 = vadd.f32 %v308, %v327
    %329 = vmatmul.f32.gmra.mxu0 %v56
    %v330 = vpop.f32.mrf.mxu0
    %v331 = vadd.f32 %v308, %v330
    %332 = vdwg.mxu0
    %v333 = vtanh.pop %v328
    %v334 = vtanh.pop %v331
    %v335 = vadd.f32 %v41, %v333
    %v336 = vadd.f32 %v42, %v334
    %338 = vset.pattern.permute.xlu0 0
    %339 = vperm.xlu0 %338, %v300
    %v340 = vpop.permute.xlu0 %339
    %343 = vset.pattern.permute.xlu0 0
    %344 = vperm.xlu0 %343, %v301
    %v345 = vpop.permute.xlu0 %344
    %v347 = vmul.f32 %v335, %v340
    %v348 = vmul.f32 %v336, %v345
    %v349 = vadd.f32 %v347, 0.0
    %v350 = vadd.f32 %v348, 0.0
    %353 = vrot.lane.b32.xlu0 %v333, 96
    %v354 = vpop.permute.xlu0 %353
    %355 = vrot.lane.b32.xlu0 %v334, 96
    %v356 = vpop.permute.xlu0 %355
    %v359 = vadd.f32 %v41, %v354
    %v360 = vadd.f32 %v42, %v356
    %361 = vset.pattern.permute.xlu0 1
    %362 = vperm.xlu0 %361, %v300
    %v363 = vpop.permute.xlu0 %362
    %365 = vset.pattern.permute.xlu0 1
    %366 = vperm.xlu0 %365, %v301
    %v367 = vpop.permute.xlu0 %366
    %v369 = vmul.f32 %v359, %v363
    %v370 = vmul.f32 %v360, %v367
    %v371 = vadd.f32 %v349, %v369
    %v372 = vadd.f32 %v350, %v370
    %373 = vrot.lane.b32.xlu0 %v333, 64
    %v374 = vpop.permute.xlu0 %373
    %375 = vrot.lane.b32.xlu0 %v334, 64
    %v376 = vpop.permute.xlu0 %375
    %v379 = vadd.f32 %v41, %v374
    %v380 = vadd.f32 %v42, %v376
    %381 = vset.pattern.permute.xlu0 2
    %382 = vperm.xlu0 %381, %v300
    %v383 = vpop.permute.xlu0 %382
    %385 = vset.pattern.permute.xlu0 2
    %386 = vperm.xlu0 %385, %v301
    %v387 = vpop.permute.xlu0 %386
    %v389 = vmul.f32 %v379, %v383
    %v390 = vmul.f32 %v380, %v387
    %v391 = vadd.f32 %v371, %v389
    %v392 = vadd.f32 %v372, %v390
    %393 = vrot.lane.b32.xlu0 %v333, 32
    %v394 = vpop.permute.xlu0 %393
    %395 = vrot.lane.b32.xlu0 %v334, 32
    %v396 = vpop.permute.xlu0 %395
    %v399 = vadd.f32 %v41, %v394
    %v400 = vadd.f32 %v42, %v396
    %401 = vset.pattern.permute.xlu0 3
    %402 = vperm.xlu0 %401, %v300
    %v403 = vpop.permute.xlu0 %402
    %405 = vset.pattern.permute.xlu0 3
    %406 = vperm.xlu0 %405, %v301
    %v407 = vpop.permute.xlu0 %406
    %v409 = vmul.f32 %v399, %v403
    %v410 = vmul.f32 %v400, %v407
    %v411 = vadd.f32 %v391, %v409
    %v412 = vadd.f32 %v392, %v410
    %413 = vst.msk [vmem:[#allocation5] sm:$0xff] %vm51, %v411
    %414 = vst.msk [vmem:[#allocation5 + $0x8] sm:$0xff] %vm51, %v412
    %vm415 = vcmask 64544
    %v416 = vsel %vm415, %v103, 0.0
    %v417 = vsel %vm415, %v118, 0.0
    %v418 = vadd.f32 %v416, %v417
    %v419 = vrot.slane %v418, 4
    %v420 = vadd.f32 %v418, %v419
    %v421 = vrot.slane %v420, 2
    %v422 = vadd.f32 %v420, %v421
    %v423 = vrot.slane %v422, 1
    %v424 = vadd.f32 %v422, %v423
    %426 = vrot.lane.b32.xlu0 %v424, 124
    %v427 = vpop.permute.xlu0 %426
    %vm429 = vcmask 24576
    %430 = vst.msk [vmem:[#allocation6] sm:$0x1] %vm429, %v427
    %v431 = vsel %vm119, %v300, 0.0
    %v432 = vsel %vm119, %v301, 0.0
    %v433 = vadd.f32 %v431, %v432
    %v434 = vrot.slane %v433, 4
    %v435 = vadd.f32 %v433, %v434
    %v436 = vrot.slane %v435, 2
    %v437 = vadd.f32 %v435, %v436
    %v438 = vrot.slane %v437, 1
    %v439 = vadd.f32 %v437, %v438
    %440 = vst.msk [vmem:[#allocation8] sm:$0x1] %vm429, %v439
    // Predicated region
    $region26: #{tpu_custom_call.1} parent=1 // pred_check
      _
    $region27: #{tpu_custom_call.1} parent=1 // pred_check_branch
      %442 = sbr.rel (0) target = $region29
    $region28: #{tpu_custom_call.1} parent=1 // pred_region
      %444 = vsyncadd [#allocation4], 0
      %s445 = sshll.u32 [#allocation5], 4
      %s446 = int_to_ptr.vmem [resolvable:$true] %s445
      %s447 = sshll.u32 %s5, 4
      %s448 = int_to_ptr.hbm [resolvable:$true] %s447
      %453 = dma.vmem_to_hbm [thread:$0]  %s446, 256, %s448, [#allocation4], 128, 128, 8
    $region29: #{tpu_custom_call.1} parent=1 // pred_fallthru
      _
    // Predicated region
    $region30: #{tpu_custom_call.1} parent=1 // pred_check
      _
    $region31: #{tpu_custom_call.1} parent=1 // pred_check_branch
      %455 = sbr.rel (0) target = $region33
    $region32: #{tpu_custom_call.1} parent=1 // pred_region
      %457 = vsyncadd [#allocation7], 0
      %s459 = sshll.u32 [#allocation6], 4
      %s460 = int_to_ptr.vmem [resolvable:$true] %s459
      %s461 = sshll.u32 %s6, 4
      %s462 = int_to_ptr.hbm [resolvable:$true] %s461
      %464 = dma.vmem_to_hbm [thread:$0]  %s460, 16, %s462, [#allocation7]
    $region33: #{tpu_custom_call.1} parent=1 // pred_fallthru
      _
    // Predicated region
    $region34: #{tpu_custom_call.1} parent=1 // pred_check
      _
    $region35: #{tpu_custom_call.1} parent=1 // pred_check_branch
      %466 = sbr.rel (0) target = $region37
    $region36: #{tpu_custom_call.1} parent=1 // pred_region
      %468 = vsyncadd [#allocation7], 0
      %s470 = sshll.u32 [#allocation8], 4
      %s471 = int_to_ptr.vmem [resolvable:$true] %s470
      %s472 = sshll.u32 %s7, 4
      %s473 = int_to_ptr.hbm [resolvable:$true] %s472
      %475 = dma.vmem_to_hbm [thread:$0]  %s471, 16, %s473, [#allocation7]
    $region37: #{tpu_custom_call.1} parent=1 // pred_fallthru
      _
    // Predicated region
    $region38: #{tpu_custom_call.1} parent=1 // pred_check
      _
    $region39: #{tpu_custom_call.1} parent=1 // pred_check_branch
      %477 = sbr.rel (0) target = $region41
    $region40: #{tpu_custom_call.1} parent=1 // pred_region
      %479 = dma.done [#allocation4], 256
    $region41: #{tpu_custom_call.1} parent=1 // pred_fallthru
      _
    // Predicated region
    $region42: #{tpu_custom_call.1} parent=1 // pred_check
      _
    $region43: #{tpu_custom_call.1} parent=1 // pred_check_branch
      %481 = sbr.rel (0) target = $region45
    $region44: #{tpu_custom_call.1} parent=1 // pred_region
      %483 = dma.done [#allocation7], 16
    $region45: #{tpu_custom_call.1} parent=1 // pred_fallthru
      _
    // Predicated region
    $region46: #{tpu_custom_call.1} parent=1 // pred_check
      _
    $region47: #{tpu_custom_call.1} parent=1 // pred_check_branch
      %485 = sbr.rel (0) target = $region49
    $region48: #{tpu_custom_call.1} parent=1 // pred_region
      %487 = dma.done [#allocation7], 16
    $region49: #{tpu_custom_call.1} parent=1 // pred_fallthru
      _
    %488 = vsyncpa [#allocation3], 1
    %489 = vsyncpa [#allocation4], 1
    %490 = vsyncpa [#allocation7], 1

</llo_original>
